<compile_context>
chip_gen: v7x
topology: tpu7x:2x2x1
jax: 0.10.0
libtpu: 0.0.40
codegen_flags: <defaults>
</compile_context>

<pallas_src>
import numpy as np

import jax
import jax.numpy as jnp
from jax.experimental import pallas as pl
from jax.experimental.pallas import tpu as pltpu

# ----------------------------- configuration -----------------------------
IN_SIZE = (4, 16, 16)          # (C, H, W)
CHANNELS = [8, 8]              # conv output channels
POOL_EVERY = 2
HIDDEN_DIMS = [32]
OUT_CLASSES = 10
KSIZE = 3
PADDING = 1
BATCH = 2

CIN, IMG_H, IMG_W = IN_SIZE
C1, C2 = CHANNELS
HIDDEN = HIDDEN_DIMS[0]
HO, WO = IMG_H // 2, IMG_W // 2           # pooled spatial dims (8, 8)
N_FEATURES = C2 * HO * WO                 # 512
ROW_STRIDE = IMG_H + 2                    # per-image padded row block (18)
N_ROWS = BATCH * ROW_STRIDE               # 36 (conv1 GEMM M, incl. per-image pad rows)
K1 = KSIZE * CIN * IMG_W                  # 192 (conv1 contraction depth, + 1 bias column)
K2 = KSIZE * IMG_W * C1                   # 384 (conv2 contraction depth)


# ------------------------------ fused kernel ------------------------------
def _fused_cnn_kernel(x1_ref, wb1_ref, wb2_ref, wm1_ref, wm2_ref, b_ref, o_ref, feat_ref):
    # x1_ref  : (36, 193)  conv1 staging (both images): row s = [xq[s] | xq[s+1] | xq[s+2] | v]
    #           where xq is the vertically zero-padded channel-planar input and v is the
    #           valid-row indicator (pad rows are fully zeroed so their output is relu(0)=0).
    # wb1_ref : (193, 128) banded conv1 GEMM weights (kh-concatenated) + bias row.
    # wb2_ref : (384, 128) banded conv2 GEMM weights (kh-concatenated), lane order (w%2,w//2,c).
    # wm1_ref : (512, 32)  FC1 weights, rows permuted to the kernel's NHWC flatten order.
    # wm2_ref : (32, 10)   FC2 weights.
    # b_ref   : (3, 128)   packed biases: conv2 (lane-tiled), fc1, fc2.
    # o_ref   : (2, 10)    logits.
    # feat_ref: (2, 512)   pooled / flattened features (VMEM scratch).

    # ---- conv1 + bias + ReLU: ONE GEMM for the whole batch (bias & pad-mask folded in) ----
    a1p = jnp.maximum(
        jnp.dot(x1_ref[...], wb1_ref[...], preferred_element_type=jnp.float32), 0.0)  # (36,128)

    # ---- conv2 + bias + ReLU: K-concat the 3 kh row-windows -> ONE GEMM ----
    m2 = N_ROWS - 2                                                                   # 34
    stag2 = jnp.concatenate(
        [a1p[0:m2, :], a1p[1:m2 + 1, :], a1p[2:m2 + 2, :]], axis=1)                   # (34,384)
    a2 = jnp.maximum(
        jnp.dot(stag2, wb2_ref[...], preferred_element_type=jnp.float32)
        + b_ref[0:1, :], 0.0)                                                         # (34,128)

    # ---- fused 2x2 max-pool, vectorized over all rows of both images ----
    # rows r = max over dh of conv2 rows (r, r+1); valid pooled rows are r = n*18 + 2*ho.
    rmax = jnp.maximum(a2[0:m2 - 1, :], a2[1:m2, :])                                  # (33,128)
    # conv2 lane order is (w%2, w//2, c) -> max over dw is a single half-lane max.
    lmax = jnp.maximum(rmax[:, 0:WO * C2], rmax[:, WO * C2:2 * WO * C2])              # (33, 64)

    # Scatter the 8 pooled rows per image into NHWC-flatten order.  (Remaining masked (1,64)
    # stores; everything feeding them is already computed with wide vector ops above.)
    for n in range(BATCH):
        base = n * ROW_STRIDE
        for ho in range(HO):
            feat_ref[n:n + 1, ho * WO * C2:(ho + 1) * WO * C2] = \
                lmax[base + 2 * ho:base + 2 * ho + 1, :]

    # ---- batched MLP: FC1 -> ReLU -> FC2 over all images at once ----
    h1 = jnp.maximum(
        jnp.dot(feat_ref[...], wm1_ref[...], preferred_element_type=jnp.float32)
        + b_ref[1:2, 0:HIDDEN], 0.0)                                                  # (2, 32)
    o_ref[...] = jnp.dot(h1, wm2_ref[...], preferred_element_type=jnp.float32) \
        + b_ref[2:3, 0:OUT_CLASSES]                                                   # (2, 10)


def _full_spec(shape):
    # one full-array block (block_shape == array dims satisfies TPU tiling rules)
    return pl.BlockSpec(shape, lambda i: (0,) * len(shape))


def cnn_forward(x_nchw, kp):
    """Full CNN forward in a single Pallas kernel.  x_nchw: (BATCH, CIN, H, W) f32."""
    # ---- layout plumbing in XLA (review item 1): relayout + pad + conv1 im2col staging ----
    # NCHW -> (B, H, C*W) channel-planar rows
    xr = jnp.transpose(x_nchw, (0, 2, 1, 3)).reshape(BATCH, IMG_H, CIN * IMG_W)
    # vertical zero pad per image, stack images along rows, add one extra guard row each end
    xp = jnp.pad(xr, ((0, 0), (1, 1), (0, 0))).reshape(N_ROWS, CIN * IMG_W)   # (36, 64)
    xq = jnp.pad(xp, ((1, 1), (0, 0)))                                        # (38, 64)
    # K-concatenated im2col rows: row s = [xq[s] | xq[s+1] | xq[s+2]]
    x1 = jnp.concatenate([xq[0:N_ROWS], xq[1:N_ROWS + 1], xq[2:N_ROWS + 2]], axis=1)  # (36,192)
    # valid-row indicator: zero the per-image vertical pad rows and carry the conv1 bias
    rows = jnp.arange(N_ROWS) % ROW_STRIDE
    valid = ((rows >= 1) & (rows <= IMG_H)).astype(x1.dtype)[:, None]         # (36, 1)
    x1 = jnp.concatenate([x1 * valid, valid], axis=1)                         # (36, 193)

    return pl.pallas_call(
        _fused_cnn_kernel,
        grid=(1,),
        in_specs=[
            _full_spec(x1.shape),
            _full_spec(kp["wb1"].shape),
            _full_spec(kp["wb2"].shape),
            _full_spec(kp["wm1"].shape),
            _full_spec(kp["wm2"].shape),
            _full_spec(kp["bias"].shape),
        ],
        out_specs=_full_spec((BATCH, OUT_CLASSES)),
        out_shape=jax.ShapeDtypeStruct((BATCH, OUT_CLASSES), jnp.float32),
        scratch_shapes=[
            pltpu.VMEM((BATCH, N_FEATURES), jnp.float32),    # pooled / flattened features
        ],
        compiler_params=pltpu.CompilerParams(dimension_semantics=("arbitrary",)),
    )(x1, kp["wb1"], kp["wb2"], kp["wm1"], kp["wm2"], kp["bias"])


# ------------------- host-side parameter preprocessing -------------------
def _conv1_gemm_weights(w1, b1):
    """3x3 'same' conv1 -> kh-concatenated banded GEMM matrix, with bias folded into an
    extra row driven by the staging's ones/valid column.  In lanes: ci*W + wi (channel
    planar).  Out lanes: wo*C1 + co."""
    w = np.asarray(w1, np.float32)
    mat = np.zeros((K1 + 1, IMG_W * C1), np.float32)
    for kh in range(KSIZE):
        for kw in range(KSIZE):
            for ci in range(CIN):
                for co in range(C1):
                    for wo in range(IMG_W):
                        wi = wo + kw - PADDING
                        if 0 <= wi < IMG_W:
                            mat[kh * CIN * IMG_W + ci * IMG_W + wi, wo * C1 + co] = \
                                w[kh, kw, ci, co]
    mat[K1, :] = np.tile(np.asarray(b1, np.float32), IMG_W)    # bias row (lane%8 == channel)
    return jnp.asarray(mat)


def _conv2_gemm_weights(w2):
    """3x3 'same' conv2 -> kh-concatenated banded GEMM matrix.  In lanes: wi*C1 + ci (conv1's
    output order).  Out lanes: (wo%2, wo//2, co) so the 2x2 pool becomes a half-lane max."""
    w = np.asarray(w2, np.float32)
    mat = np.zeros((K2, IMG_W * C2), np.float32)
    for kh in range(KSIZE):
        for kw in range(KSIZE):
            for ci in range(C1):
                for co in range(C2):
                    for wo in range(IMG_W):
                        wi = wo + kw - PADDING
                        if 0 <= wi < IMG_W:
                            col = (wo % 2) * (WO * C2) + (wo // 2) * C2 + co
                            mat[kh * IMG_W * C1 + wi * C1 + ci, col] = w[kh, kw, ci, co]
    return jnp.asarray(mat)


def prepare_kernel_params(params):
    """Derive the kernel-side parameter layout from canonical (PyTorch-like) params."""
    (w1c, b1c), (w2c, b2c) = params["conv"]
    (w1m, b1m), (w2m, b2m) = params["mlp"]

    wb1 = _conv1_gemm_weights(w1c, b1c)                       # (193, 128)
    wb2 = _conv2_gemm_weights(w2c)                            # (384, 128)

    # FC1 rows permuted from PyTorch NCHW-flatten order to the kernel's NHWC-flatten order
    perm = np.arange(C2 * HO * WO).reshape(C2, HO, WO).transpose(1, 2, 0).reshape(-1)
    wm1 = jnp.asarray(np.asarray(w1m, np.float32)[perm, :])   # (512, 32)

    bias = np.zeros((3, 128), np.float32)
    bias[0, :] = np.tile(np.asarray(b2c, np.float32), IMG_W)  # conv2 bias, lane-tiled
    bias[1, :HIDDEN] = np.asarray(b1m, np.float32)
    bias[2, :OUT_CLASSES] = np.asarray(b2m, np.float32)

    return {"wb1": wb1, "wb2": wb2, "wm1": wm1,
            "wm2": jnp.asarray(w2m, jnp.float32), "bias": jnp.asarray(bias)}


# ---------------------------- deterministic init ----------------------------
def init_params(key):
    cin = CIN
    params = {"conv": [], "mlp": []}
    for cout in CHANNELS:
        key, kw_, kb_ = jax.random.split(key, 3)
        wgt = 0.1 * jax.random.normal(kw_, (KSIZE, KSIZE, cin, cout), jnp.float32)  # HWIO
        bia = 0.1 * jax.random.normal(kb_, (cout,), jnp.float32)
        params["conv"].append((wgt, bia))
        cin = cout
    n_pools = len(CHANNELS) // POOL_EVERY
    hf, wf = IMG_H // (2 ** n_pools), IMG_W // (2 ** n_pools)
    dims = [CHANNELS[-1] * hf * wf] + list(HIDDEN_DIMS) + [OUT_CLASSES]
    for din, dout in zip(dims[:-1], dims[1:]):
        key, kw_, kb_ = jax.random.split(key, 3)
        wgt = 0.05 * jax.random.normal(kw_, (din, dout), jnp.float32)  # (in, out), NCHW rows
        bia = 0.05 * jax.random.normal(kb_, (dout,), jnp.float32)
        params["mlp"].append((wgt, bia))
    return params


# ------------------------------ pure-JAX reference ------------------------------
def reference_forward(x_nchw, params):
    x = jnp.transpose(x_nchw, (0, 2, 3, 1)).astype(jnp.float32)   # NCHW -> NHWC
    for i, (w, b) in enumerate(params["conv"]):
        y = jax.lax.conv_general_dilated(
            x, w, window_strides=(1, 1), padding=[(PADDING, PADDING)] * 2,
            dimension_numbers=("NHWC", "HWIO", "NHWC"))
        x = jnp.maximum(y + b, 0.0)
        if (i + 1) % POOL_EVERY == 0:
            N, H, W, C = x.shape
            x = jnp.max(x.reshape(N, H // 2, 2, W // 2, 2, C), axis=(2, 4))
    # PyTorch-style flatten: NCHW order
    feats = jnp.transpose(x, (0, 3, 1, 2)).reshape(x.shape[0], -1)
    (w1, b1), (w2, b2) = params["mlp"]
    h = jnp.maximum(feats @ w1 + b1, 0.0)
    return h @ w2 + b2


# ----------------------------------- main -----------------------------------
if __name__ == "__main__":
    key = jax.random.PRNGKey(0)
    key, kx = jax.random.split(key)
    x = jax.random.normal(kx, (BATCH, *IN_SIZE), jnp.float32)     # NCHW input
    params = init_params(key)
    kparams = prepare_kernel_params(params)                       # one-time host-side transform

    out = jax.block_until_ready(jax.jit(cnn_forward)(x, kparams))
    ref = jax.block_until_ready(reference_forward(x, params))

    assert out.shape == (BATCH, OUT_CLASSES)
    assert bool(jnp.all(jnp.isfinite(out)))
    # all-f32 path -> tight tolerance (review correctness concern)
    assert bool(jnp.allclose(out, ref, rtol=1e-4, atol=1e-4))

    print("KERNEL_OK")
</pallas_src>

<mosaic_0001>
module attributes {stable_mosaic.version = 11 : i64} {
  func.func @_fused_cnn_kernel(%arg0: i32, %arg1: memref<36x193xf32, #tpu.memory_space<vmem>>, %arg2: memref<193x128xf32, #tpu.memory_space<vmem>>, %arg3: memref<384x128xf32, #tpu.memory_space<vmem>>, %arg4: memref<512x32xf32, #tpu.memory_space<vmem>>, %arg5: memref<32x10xf32, #tpu.memory_space<vmem>>, %arg6: memref<3x128xf32, #tpu.memory_space<vmem>>, %arg7: memref<2x10xf32, #tpu.memory_space<vmem>>, %arg8: memref<2x512xf32, #tpu.memory_space<vmem>>) attributes {dimension_semantics = [#tpu.dimension_semantics<arbitrary>], iteration_bounds = array<i64: 1>, scalar_prefetch = 0 : i64, scratch_operands = 1 : i64, tpu.core_type = #tpu.core_type<tc>, window_params = [{pipeline_mode = #tpu.pipeline_mode<synchronous>, transform_indices = @transform_0, window_bounds = array<i64: 36, 193>}, {pipeline_mode = #tpu.pipeline_mode<synchronous>, transform_indices = @transform_1, window_bounds = array<i64: 193, 128>}, {pipeline_mode = #tpu.pipeline_mode<synchronous>, transform_indices = @transform_2, window_bounds = array<i64: 384, 128>}, {pipeline_mode = #tpu.pipeline_mode<synchronous>, transform_indices = @transform_3, window_bounds = array<i64: 512, 32>}, {pipeline_mode = #tpu.pipeline_mode<synchronous>, transform_indices = @transform_4, window_bounds = array<i64: 32, 10>}, {pipeline_mode = #tpu.pipeline_mode<synchronous>, transform_indices = @transform_5, window_bounds = array<i64: 3, 128>}, {pipeline_mode = #tpu.pipeline_mode<synchronous>, transform_indices = @transform_6, window_bounds = array<i64: 2, 10>}]} {
    %c0 = arith.constant 0 : index
    %c0_0 = arith.constant 0 : index
    %0 = vector.load %arg1[%c0, %c0_0] : memref<36x193xf32, #tpu.memory_space<vmem>>, vector<36x193xf32>
    %c0_1 = arith.constant 0 : index
    %c0_2 = arith.constant 0 : index
    %1 = vector.load %arg2[%c0_1, %c0_2] : memref<193x128xf32, #tpu.memory_space<vmem>>, vector<193x128xf32>
    %cst = arith.constant dense<0.000000e+00> : vector<36x128xf32>
    %2 = tpu.matmul %0, %1, %cst {dimension_numbers = #tpu.dot_dimension_numbers<[1], [0], [0], [1], [0, 0, 1, 1], [], []>} : vector<36x193xf32>, vector<193x128xf32>, vector<36x128xf32> -> vector<36x128xf32>
    %cst_3 = arith.constant 0.000000e+00 : f32
    %3 = vector.broadcast %cst_3 : f32 to vector<36x128xf32>
    %4 = arith.maximumf %2, %3 : vector<36x128xf32>
    %5 = vector.extract_strided_slice %4 {offsets = [0, 0], sizes = [34, 128], strides = [1, 1]} : vector<36x128xf32> to vector<34x128xf32>
    %6 = vector.extract_strided_slice %4 {offsets = [1, 0], sizes = [34, 128], strides = [1, 1]} : vector<36x128xf32> to vector<34x128xf32>
    %7 = vector.extract_strided_slice %4 {offsets = [2, 0], sizes = [34, 128], strides = [1, 1]} : vector<36x128xf32> to vector<34x128xf32>
    %8 = tpu.concatenate %5, %6, %7 in 1 : vector<34x128xf32>, vector<34x128xf32>, vector<34x128xf32> -> vector<34x384xf32>
    %c0_4 = arith.constant 0 : index
    %c0_5 = arith.constant 0 : index
    %9 = vector.load %arg3[%c0_4, %c0_5] : memref<384x128xf32, #tpu.memory_space<vmem>>, vector<384x128xf32>
    %cst_6 = arith.constant dense<0.000000e+00> : vector<34x128xf32>
    %10 = tpu.matmul %8, %9, %cst_6 {dimension_numbers = #tpu.dot_dimension_numbers<[1], [0], [0], [1], [0, 0, 1, 1], [], []>} : vector<34x384xf32>, vector<384x128xf32>, vector<34x128xf32> -> vector<34x128xf32>
    %c0_7 = arith.constant 0 : index
    %c0_8 = arith.constant 0 : index
    %11 = vector.load %arg6[%c0_7, %c0_8] : memref<3x128xf32, #tpu.memory_space<vmem>>, vector<1x128xf32>
    %12 = vector.broadcast %11 : vector<1x128xf32> to vector<34x128xf32>
    %13 = arith.addf %10, %12 : vector<34x128xf32>
    %cst_9 = arith.constant 0.000000e+00 : f32
    %14 = vector.broadcast %cst_9 : f32 to vector<34x128xf32>
    %15 = arith.maximumf %13, %14 : vector<34x128xf32>
    %16 = vector.extract_strided_slice %15 {offsets = [0, 0], sizes = [33, 128], strides = [1, 1]} : vector<34x128xf32> to vector<33x128xf32>
    %17 = vector.extract_strided_slice %15 {offsets = [1, 0], sizes = [33, 128], strides = [1, 1]} : vector<34x128xf32> to vector<33x128xf32>
    %18 = arith.maximumf %16, %17 : vector<33x128xf32>
    %19 = vector.extract_strided_slice %18 {offsets = [0, 0], sizes = [33, 64], strides = [1, 1]} : vector<33x128xf32> to vector<33x64xf32>
    %20 = vector.extract_strided_slice %18 {offsets = [0, 64], sizes = [33, 64], strides = [1, 1]} : vector<33x128xf32> to vector<33x64xf32>
    %21 = arith.maximumf %19, %20 : vector<33x64xf32>
    %22 = vector.extract_strided_slice %21 {offsets = [0, 0], sizes = [1, 64], strides = [1, 1]} : vector<33x64xf32> to vector<1x64xf32>
    %c0_10 = arith.constant 0 : index
    %c0_11 = arith.constant 0 : index
    %23 = vector.load %arg8[%c0_10, %c0_11] : memref<2x512xf32, #tpu.memory_space<vmem>>, vector<1x64xf32>
    tpu.vector_store %arg8[%c0_10, %c0_11], %22 {strides = array<i32>} : memref<2x512xf32, #tpu.memory_space<vmem>>, vector<1x64xf32>,
    %24 = vector.extract_strided_slice %21 {offsets = [2, 0], sizes = [1, 64], strides = [1, 1]} : vector<33x64xf32> to vector<1x64xf32>
    %c0_12 = arith.constant 0 : index
    %c64 = arith.constant 64 : index
    %25 = vector.load %arg8[%c0_12, %c64] : memref<2x512xf32, #tpu.memory_space<vmem>>, vector<1x64xf32>
    tpu.vector_store %arg8[%c0_12, %c64], %24 {strides = array<i32>} : memref<2x512xf32, #tpu.memory_space<vmem>>, vector<1x64xf32>,
    %26 = vector.extract_strided_slice %21 {offsets = [4, 0], sizes = [1, 64], strides = [1, 1]} : vector<33x64xf32> to vector<1x64xf32>
    %c0_13 = arith.constant 0 : index
    %c128 = arith.constant 128 : index
    %27 = vector.load %arg8[%c0_13, %c128] : memref<2x512xf32, #tpu.memory_space<vmem>>, vector<1x64xf32>
    tpu.vector_store %arg8[%c0_13, %c128], %26 {strides = array<i32>} : memref<2x512xf32, #tpu.memory_space<vmem>>, vector<1x64xf32>,
    %28 = vector.extract_strided_slice %21 {offsets = [6, 0], sizes = [1, 64], strides = [1, 1]} : vector<33x64xf32> to vector<1x64xf32>
    %c0_14 = arith.constant 0 : index
    %c192 = arith.constant 192 : index
    %29 = vector.load %arg8[%c0_14, %c192] : memref<2x512xf32, #tpu.memory_space<vmem>>, vector<1x64xf32>
    tpu.vector_store %arg8[%c0_14, %c192], %28 {strides = array<i32>} : memref<2x512xf32, #tpu.memory_space<vmem>>, vector<1x64xf32>,
    %30 = vector.extract_strided_slice %21 {offsets = [8, 0], sizes = [1, 64], strides = [1, 1]} : vector<33x64xf32> to vector<1x64xf32>
    %c0_15 = arith.constant 0 : index
    %c256 = arith.constant 256 : index
    %31 = vector.load %arg8[%c0_15, %c256] : memref<2x512xf32, #tpu.memory_space<vmem>>, vector<1x64xf32>
    tpu.vector_store %arg8[%c0_15, %c256], %30 {strides = array<i32>} : memref<2x512xf32, #tpu.memory_space<vmem>>, vector<1x64xf32>,
    %32 = vector.extract_strided_slice %21 {offsets = [10, 0], sizes = [1, 64], strides = [1, 1]} : vector<33x64xf32> to vector<1x64xf32>
    %c0_16 = arith.constant 0 : index
    %c320 = arith.constant 320 : index
    %33 = vector.load %arg8[%c0_16, %c320] : memref<2x512xf32, #tpu.memory_space<vmem>>, vector<1x64xf32>
    tpu.vector_store %arg8[%c0_16, %c320], %32 {strides = array<i32>} : memref<2x512xf32, #tpu.memory_space<vmem>>, vector<1x64xf32>,
    %34 = vector.extract_strided_slice %21 {offsets = [12, 0], sizes = [1, 64], strides = [1, 1]} : vector<33x64xf32> to vector<1x64xf32>
    %c0_17 = arith.constant 0 : index
    %c384 = arith.constant 384 : index
    %35 = vector.load %arg8[%c0_17, %c384] : memref<2x512xf32, #tpu.memory_space<vmem>>, vector<1x64xf32>
    tpu.vector_store %arg8[%c0_17, %c384], %34 {strides = array<i32>} : memref<2x512xf32, #tpu.memory_space<vmem>>, vector<1x64xf32>,
    %36 = vector.extract_strided_slice %21 {offsets = [14, 0], sizes = [1, 64], strides = [1, 1]} : vector<33x64xf32> to vector<1x64xf32>
    %c0_18 = arith.constant 0 : index
    %c448 = arith.constant 448 : index
    %37 = vector.load %arg8[%c0_18, %c448] : memref<2x512xf32, #tpu.memory_space<vmem>>, vector<1x64xf32>
    tpu.vector_store %arg8[%c0_18, %c448], %36 {strides = array<i32>} : memref<2x512xf32, #tpu.memory_space<vmem>>, vector<1x64xf32>,
    %38 = vector.extract_strided_slice %21 {offsets = [18, 0], sizes = [1, 64], strides = [1, 1]} : vector<33x64xf32> to vector<1x64xf32>
    %c1 = arith.constant 1 : index
    %c0_19 = arith.constant 0 : index
    %39 = vector.load %arg8[%c1, %c0_19] : memref<2x512xf32, #tpu.memory_space<vmem>>, vector<1x64xf32>
    tpu.vector_store %arg8[%c1, %c0_19], %38 {strides = array<i32>} : memref<2x512xf32, #tpu.memory_space<vmem>>, vector<1x64xf32>,
    %40 = vector.extract_strided_slice %21 {offsets = [20, 0], sizes = [1, 64], strides = [1, 1]} : vector<33x64xf32> to vector<1x64xf32>
    %c1_20 = arith.constant 1 : index
    %c64_21 = arith.constant 64 : index
    %41 = vector.load %arg8[%c1_20, %c64_21] : memref<2x512xf32, #tpu.memory_space<vmem>>, vector<1x64xf32>
    tpu.vector_store %arg8[%c1_20, %c64_21], %40 {strides = array<i32>} : memref<2x512xf32, #tpu.memory_space<vmem>>, vector<1x64xf32>,
    %42 = vector.extract_strided_slice %21 {offsets = [22, 0], sizes = [1, 64], strides = [1, 1]} : vector<33x64xf32> to vector<1x64xf32>
    %c1_22 = arith.constant 1 : index
    %c128_23 = arith.constant 128 : index
    %43 = vector.load %arg8[%c1_22, %c128_23] : memref<2x512xf32, #tpu.memory_space<vmem>>, vector<1x64xf32>
    tpu.vector_store %arg8[%c1_22, %c128_23], %42 {strides = array<i32>} : memref<2x512xf32, #tpu.memory_space<vmem>>, vector<1x64xf32>,
    %44 = vector.extract_strided_slice %21 {offsets = [24, 0], sizes = [1, 64], strides = [1, 1]} : vector<33x64xf32> to vector<1x64xf32>
    %c1_24 = arith.constant 1 : index
    %c192_25 = arith.constant 192 : index
    %45 = vector.load %arg8[%c1_24, %c192_25] : memref<2x512xf32, #tpu.memory_space<vmem>>, vector<1x64xf32>
    tpu.vector_store %arg8[%c1_24, %c192_25], %44 {strides = array<i32>} : memref<2x512xf32, #tpu.memory_space<vmem>>, vector<1x64xf32>,
    %46 = vector.extract_strided_slice %21 {offsets = [26, 0], sizes = [1, 64], strides = [1, 1]} : vector<33x64xf32> to vector<1x64xf32>
    %c1_26 = arith.constant 1 : index
    %c256_27 = arith.constant 256 : index
    %47 = vector.load %arg8[%c1_26, %c256_27] : memref<2x512xf32, #tpu.memory_space<vmem>>, vector<1x64xf32>
    tpu.vector_store %arg8[%c1_26, %c256_27], %46 {strides = array<i32>} : memref<2x512xf32, #tpu.memory_space<vmem>>, vector<1x64xf32>,
    %48 = vector.extract_strided_slice %21 {offsets = [28, 0], sizes = [1, 64], strides = [1, 1]} : vector<33x64xf32> to vector<1x64xf32>
    %c1_28 = arith.constant 1 : index
    %c320_29 = arith.constant 320 : index
    %49 = vector.load %arg8[%c1_28, %c320_29] : memref<2x512xf32, #tpu.memory_space<vmem>>, vector<1x64xf32>
    tpu.vector_store %arg8[%c1_28, %c320_29], %48 {strides = array<i32>} : memref<2x512xf32, #tpu.memory_space<vmem>>, vector<1x64xf32>,
    %50 = vector.extract_strided_slice %21 {offsets = [30, 0], sizes = [1, 64], strides = [1, 1]} : vector<33x64xf32> to vector<1x64xf32>
    %c1_30 = arith.constant 1 : index
    %c384_31 = arith.constant 384 : index
    %51 = vector.load %arg8[%c1_30, %c384_31] : memref<2x512xf32, #tpu.memory_space<vmem>>, vector<1x64xf32>
    tpu.vector_store %arg8[%c1_30, %c384_31], %50 {strides = array<i32>} : memref<2x512xf32, #tpu.memory_space<vmem>>, vector<1x64xf32>,
    %52 = vector.extract_strided_slice %21 {offsets = [32, 0], sizes = [1, 64], strides = [1, 1]} : vector<33x64xf32> to vector<1x64xf32>
    %c1_32 = arith.constant 1 : index
    %c448_33 = arith.constant 448 : index
    %53 = vector.load %arg8[%c1_32, %c448_33] : memref<2x512xf32, #tpu.memory_space<vmem>>, vector<1x64xf32>
    tpu.vector_store %arg8[%c1_32, %c448_33], %52 {strides = array<i32>} : memref<2x512xf32, #tpu.memory_space<vmem>>, vector<1x64xf32>,
    %c0_34 = arith.constant 0 : index
    %c0_35 = arith.constant 0 : index
    %54 = vector.load %arg8[%c0_34, %c0_35] : memref<2x512xf32, #tpu.memory_space<vmem>>, vector<2x512xf32>
    %c0_36 = arith.constant 0 : index
    %c0_37 = arith.constant 0 : index
    %55 = vector.load %arg4[%c0_36, %c0_37] : memref<512x32xf32, #tpu.memory_space<vmem>>, vector<512x32xf32>
    %cst_38 = arith.constant dense<0.000000e+00> : vector<2x32xf32>
    %56 = tpu.matmul %54, %55, %cst_38 {dimension_numbers = #tpu.dot_dimension_numbers<[1], [0], [0], [1], [0, 0, 1, 1], [], []>} : vector<2x512xf32>, vector<512x32xf32>, vector<2x32xf32> -> vector<2x32xf32>
    %c1_39 = arith.constant 1 : index
    %c0_40 = arith.constant 0 : index
    %57 = vector.load %arg6[%c1_39, %c0_40] : memref<3x128xf32, #tpu.memory_space<vmem>>, vector<1x32xf32>
    %58 = vector.broadcast %57 : vector<1x32xf32> to vector<2x32xf32>
    %59 = arith.addf %56, %58 : vector<2x32xf32>
    %cst_41 = arith.constant 0.000000e+00 : f32
    %60 = vector.broadcast %cst_41 : f32 to vector<2x32xf32>
    %61 = arith.maximumf %59, %60 : vector<2x32xf32>
    %c0_42 = arith.constant 0 : index
    %c0_43 = arith.constant 0 : index
    %62 = vector.load %arg5[%c0_42, %c0_43] : memref<32x10xf32, #tpu.memory_space<vmem>>, vector<32x10xf32>
    %cst_44 = arith.constant dense<0.000000e+00> : vector<2x10xf32>
    %63 = tpu.matmul %61, %62, %cst_44 {dimension_numbers = #tpu.dot_dimension_numbers<[1], [0], [0], [1], [0, 0, 1, 1], [], []>} : vector<2x32xf32>, vector<32x10xf32>, vector<2x10xf32> -> vector<2x10xf32>
    %c2 = arith.constant 2 : index
    %c0_45 = arith.constant 0 : index
    %64 = vector.load %arg6[%c2, %c0_45] : memref<3x128xf32, #tpu.memory_space<vmem>>, vector<1x10xf32>
    %65 = vector.broadcast %64 : vector<1x10xf32> to vector<2x10xf32>
    %66 = arith.addf %63, %65 : vector<2x10xf32>
    %c0_46 = arith.constant 0 : index
    %c0_47 = arith.constant 0 : index
    %67 = vector.load %arg7[%c0_46, %c0_47] : memref<2x10xf32, #tpu.memory_space<vmem>>, vector<2x10xf32>
    tpu.vector_store %arg7[%c0_46, %c0_47], %66 {strides = array<i32>} : memref<2x10xf32, #tpu.memory_space<vmem>>, vector<2x10xf32>,
    return
  }
  func.func @transform_0(%arg0: i32) -> (i32, i32) {
    %c0_i32 = arith.constant 0 : i32
    %c0_i32_0 = arith.constant 0 : i32
    %c0_i32_1 = arith.constant 0 : i32
    return %c0_i32, %c0_i32_0 : i32, i32
  }
  func.func @transform_1(%arg0: i32) -> (i32, i32) {
    %c0_i32 = arith.constant 0 : i32
    %c0_i32_0 = arith.constant 0 : i32
    %c0_i32_1 = arith.constant 0 : i32
    return %c0_i32, %c0_i32_0 : i32, i32
  }
  func.func @transform_2(%arg0: i32) -> (i32, i32) {
    %c0_i32 = arith.constant 0 : i32
    %c0_i32_0 = arith.constant 0 : i32
    %c0_i32_1 = arith.constant 0 : i32
    return %c0_i32, %c0_i32_0 : i32, i32
  }
  func.func @transform_3(%arg0: i32) -> (i32, i32) {
    %c0_i32 = arith.constant 0 : i32
    %c0_i32_0 = arith.constant 0 : i32
    %c0_i32_1 = arith.constant 0 : i32
    return %c0_i32, %c0_i32_0 : i32, i32
  }
  func.func @transform_4(%arg0: i32) -> (i32, i32) {
    %c0_i32 = arith.constant 0 : i32
    %c0_i32_0 = arith.constant 0 : i32
    %c0_i32_1 = arith.constant 0 : i32
    return %c0_i32, %c0_i32_0 : i32, i32
  }
  func.func @transform_5(%arg0: i32) -> (i32, i32) {
    %c0_i32 = arith.constant 0 : i32
    %c0_i32_0 = arith.constant 0 : i32
    %c0_i32_1 = arith.constant 0 : i32
    return %c0_i32, %c0_i32_0 : i32, i32
  }
  func.func @transform_6(%arg0: i32) -> (i32, i32) {
    %c0_i32 = arith.constant 0 : i32
    %c0_i32_0 = arith.constant 0 : i32
    %c0_i32_1 = arith.constant 0 : i32
    return %c0_i32, %c0_i32_0 : i32, i32
  }
}

</mosaic_0001>

<llo_original>
// kernel: cnn_forward.1
$region0: #{cnn_forward.1}
  #allocation0 [shape = 'u32[]', space=smem, size = 0x4, offset = 0x4, fixed_abs, tag = 'smem constant byte address 0x4 - core index']
  #allocation1 [shape = 'u32[144,128]{1,0:T(1,128)}', space=vmem, size = 0x12000, scoped, tag = 'internal scratch']
  #allocation2 [shape = 'f32[2,512]{1,0:T(2,128)}', space=vmem, size = 0x1000, scoped, tag = 'scratch operand']
  %s0 = inlined_call_operand.vmem [shape: f32[36,193], index: 0, kind: input, shape index: {}]
  %s1 = inlined_call_operand.vmem [shape: f32[193,128], index: 1, kind: input, shape index: {}]
  %s2 = inlined_call_operand.vmem [shape: f32[384,128], index: 2, kind: input, shape index: {}]
  %s3 = inlined_call_operand.vmem [shape: f32[512,32], index: 3, kind: input, shape index: {}]
  %s4 = inlined_call_operand.vmem [shape: f32[32,10], index: 4, kind: input, shape index: {}]
  %s5 = inlined_call_operand.vmem [shape: f32[3,128], index: 5, kind: input, shape index: {}]
  %s6 = inlined_call_operand.hbm [shape: f32[2,10], index: 6, kind: output, shape index: {}]
  %s7 = sld [smem:[#allocation0]]
  $region34: #{cnn_forward.1} parent=0
    _
  %s9 = ssub.s32 1, %s7
  %s10 = scalar_select 0, %s9, %s7
  $region1: #{cnn_forward.1} parent=0
    #allocation3 [shape = 'u8[1024]{0}', space=vmem, size = 0x400, scoped, tag = 'output window, operand 0, single buffered']
    #allocation4 [shape = 's32[1]{0}', space=sflag, size = 0x4, scoped, tag = 'scoped memory for cnn_forward.1']
    %11 = vsyncpa [#allocation4], 0
    // Predicated region
    $region2: #{cnn_forward.1} parent=1 // pred_check
      _
    $region3: #{cnn_forward.1} parent=1 // pred_check_branch
      %13 = sbr.rel (0) target = $region5
    $region4: #{cnn_forward.1} parent=1 // pred_region
      _
    $region5: #{cnn_forward.1} parent=1 // pred_fallthru
      _
    // Predicated region
    $region6: #{cnn_forward.1} parent=1 // pred_check
      _
    $region7: #{cnn_forward.1} parent=1 // pred_check_branch
      %15 = sbr.rel (0) target = $region9
    $region8: #{cnn_forward.1} parent=1 // pred_region
      _
    $region9: #{cnn_forward.1} parent=1 // pred_fallthru
      _
    // Predicated region
    $region10: #{cnn_forward.1} parent=1 // pred_check
      _
    $region11: #{cnn_forward.1} parent=1 // pred_check_branch
      %17 = sbr.rel (0) target = $region13
    $region12: #{cnn_forward.1} parent=1 // pred_region
      _
    $region13: #{cnn_forward.1} parent=1 // pred_fallthru
      _
    // Predicated region
    $region14: #{cnn_forward.1} parent=1 // pred_check
      _
    $region15: #{cnn_forward.1} parent=1 // pred_check_branch
      %19 = sbr.rel (0) target = $region17
    $region16: #{cnn_forward.1} parent=1 // pred_region
      _
    $region17: #{cnn_forward.1} parent=1 // pred_fallthru
      _
    // Predicated region
    $region18: #{cnn_forward.1} parent=1 // pred_check
      _
    $region19: #{cnn_forward.1} parent=1 // pred_check_branch
      %21 = sbr.rel (0) target = $region21
    $region20: #{cnn_forward.1} parent=1 // pred_region
      _
    $region21: #{cnn_forward.1} parent=1 // pred_fallthru
      _
    // Predicated region
    $region22: #{cnn_forward.1} parent=1 // pred_check
      _
    $region23: #{cnn_forward.1} parent=1 // pred_check_branch
      %23 = sbr.rel (0) target = $region25
    $region24: #{cnn_forward.1} parent=1 // pred_region
      _
    $region25: #{cnn_forward.1} parent=1 // pred_fallthru
      _
    %v24 = vld [vmem:[%s0] sm:$0xff]
    %v25 = vld [vmem:[%s0 + $0x8] sm:$0xff]
    %v26 = vld [vmem:[%s0 + $0x10] sm:$0xff]
    %v27 = vld [vmem:[%s0 + $0x18] sm:$0xff]
    %v28 = vld [vmem:[%s0 + $0x20] sm:$0xff]
    %v29 = vld [vmem:[%s0 + $0x28] sm:$0xff]
    %v30 = vld [vmem:[%s0 + $0x30] sm:$0xff]
    %v31 = vld [vmem:[%s0 + $0x38] sm:$0xff]
    %v32 = vld [vmem:[%s0 + $0x40] sm:$0xf]
    %v33 = vld [vmem:[%s0 + $0x48] sm:$0xf]
    %v34 = vld [vmem:[%s1] sm:$0xff]
    %v35 = vld [vmem:[%s1 + $0x8] sm:$0xff]
    %v36 = vld [vmem:[%s1 + $0x10] sm:$0xff]
    %v37 = vld [vmem:[%s1 + $0x18] sm:$0xff]
    %v38 = vld [vmem:[%s1 + $0x20] sm:$0xff]
    %v39 = vld [vmem:[%s1 + $0x28] sm:$0xff]
    %v40 = vld [vmem:[%s1 + $0x30] sm:$0xff]
    %v41 = vld [vmem:[%s1 + $0x38] sm:$0xff]
    %v42 = vld [vmem:[%s1 + $0x40] sm:$0xff]
    %v43 = vld [vmem:[%s1 + $0x48] sm:$0xff]
    %v44 = vld [vmem:[%s1 + $0x50] sm:$0xff]
    %v45 = vld [vmem:[%s1 + $0x58] sm:$0xff]
    %v46 = vld [vmem:[%s1 + $0x60] sm:$0xff]
    %v47 = vld [vmem:[%s1 + $0x68] sm:$0xff]
    %v48 = vld [vmem:[%s1 + $0x70] sm:$0xff]
    %v49 = vld [vmem:[%s1 + $0x78] sm:$0xff]
    %v50 = vld [vmem:[%s1 + $0x80] sm:$0xff]
    %v51 = vld [vmem:[%s1 + $0x88] sm:$0xff]
    %v52 = vld [vmem:[%s1 + $0x90] sm:$0xff]
    %v53 = vld [vmem:[%s1 + $0x98] sm:$0xff]
    %v54 = vld [vmem:[%s1 + $0xa0] sm:$0xff]
    %v55 = vld [vmem:[%s1 + $0xa8] sm:$0xff]
    %v56 = vld [vmem:[%s1 + $0xb0] sm:$0xff]
    %v57 = vld [vmem:[%s1 + $0xb8] sm:$0xff]
    %v58 = vld [vmem:[%s1 + $0xc0] sm:$0x1]
    %vm59 = vcmask 531456
    %v61 = vsel %vm59, %v25, 0
    %v64 = vsel %vm59, %v27, 0
    %v67 = vsel %vm59, %v29, 0
    %v70 = vsel %vm59, %v31, 0
    %v73 = vsel %vm59, %v33, 0
    %vm75 = vcmask 1040384
    %v77 = vsel %vm75, %v58, 0
    %79 = vmatprep.subr.mxu0 0.0
    %80 = vmatpush1.msra.mxu0 %v34
    %81 = vmatprep.subr.mxu0 0.0
    %82 = vmatpush1.msra.mxu0 %v35
    %83 = vmatprep.subr.mxu0 0.0
    %84 = vmatpush1.msra.mxu0 %v36
    %85 = vmatprep.subr.mxu0 0.0
    %86 = vmatpush1.msra.mxu0 %v37
    %87 = vmatprep.subr.mxu0 0.0
    %88 = vmatpush1.msra.mxu0 %v38
    %89 = vmatprep.subr.mxu0 0.0
    %90 = vmatpush1.msra.mxu0 %v39
    %91 = vmatprep.subr.mxu0 0.0
    %92 = vmatpush1.msra.mxu0 %v40
    %93 = vmatprep.subr.mxu0 0.0
    %94 = vmatpush1.msra.mxu0 %v41
    %95 = vmatprep.subr.mxu0 0.0
    %96 = vmatpush1.msra.mxu0 %v42
    %97 = vmatprep.subr.mxu0 0.0
    %98 = vmatpush1.msra.mxu0 %v43
    %99 = vmatprep.subr.mxu0 0.0
    %100 = vmatpush1.msra.mxu0 %v44
    %101 = vmatprep.subr.mxu0 0.0
    %102 = vmatpush1.msra.mxu0 %v45
    %103 = vmatprep.subr.mxu0 0.0
    %104 = vmatpush1.msra.mxu0 %v46
    %105 = vmatprep.subr.mxu0 0.0
    %106 = vmatpush1.msra.mxu0 %v47
    %107 = vmatprep.subr.mxu0 0.0
    %108 = vmatpush1.msra.mxu0 %v48
    %109 = vmatprep.subr.mxu0 0.0
    %110 = vmatpush1.msra.mxu0 %v49
    %111 = vmatprep.subr.mxu0 0.0
    %112 = vmatpush1.msra.mxu0 %v50
    %113 = vmatprep.subr.mxu0 0.0
    %114 = vmatpush1.msra.mxu0 %v51
    %115 = vmatprep.subr.mxu0 0.0
    %116 = vmatpush1.msra.mxu0 %v52
    %117 = vmatprep.subr.mxu0 0.0
    %118 = vmatpush1.msra.mxu0 %v53
    %119 = vmatprep.subr.mxu0 0.0
    %120 = vmatpush1.msra.mxu0 %v54
    %121 = vmatprep.subr.mxu0 0.0
    %122 = vmatpush1.msra.mxu0 %v55
    %123 = vmatprep.subr.mxu0 0.0
    %124 = vmatpush1.msra.mxu0 %v56
    %125 = vmatprep.subr.mxu0 0.0
    %126 = vmatpush1.msra.mxu0 %v57
    %127 = vmatprep.subr.mxu0 0.0
    %128 = vmatpush1.msra.mxu0 %v77
    %129 = vmatprep.subr.mxu0 0.0
    %130 = vmatpush1.msra.mxu0 0.0
    %131 = vmatprep.subr.mxu0 0.0
    %132 = vmatpush1.msra.mxu0 0.0
    %133 = vmatprep.subr.mxu0 0.0
    %134 = vmatpush1.msra.mxu0 0.0
    %135 = vmatprep.subr.mxu0 0.0
    %136 = vmatpush1.msra.mxu0 0.0
    %137 = vmatprep.subr.mxu0 0.0
    %138 = vmatpush1.msra.mxu0 0.0
    %139 = vmatprep.subr.mxu0 0.0
    %140 = vmatpush1.msra.mxu0 0.0
    %141 = vmatprep.subr.mxu0 0.0
    %142 = vmatpush1.msra.mxu0 0.0
    %143 = vmatprep.mubr.f32.mxu0 %v61
    %144 = vmatmul.mubr.f32.gmra.mrb[0].mxu0 %v24
    %v145 = vpop.f32.mrb[0].mxu0
    %v146 = vadd.f32 0.0, %v145
    %v147 = vpop.f32.mrb[0].mxu0
    %148 = vmatprep.mubr.f32.mxu0 %v64
    %149 = vmatmul.mubr.f32.gmra.mrb[0].mxu0 %v26
    %v150 = vpop.f32.mrb[0].mxu0
    %v151 = vadd.f32 0.0, %v150
    %v152 = vpop.f32.mrb[0].mxu0
    %153 = vmatprep.mubr.f32.mxu0 %v67
    %154 = vmatmul.mubr.f32.gmra.mrb[0].mxu0 %v28
    %v155 = vpop.f32.mrb[0].mxu0
    %v156 = vadd.f32 0.0, %v155
    %v157 = vpop.f32.mrb[0].mxu0
    %158 = vmatprep.mubr.f32.mxu0 %v70
    %159 = vmatmul.mubr.f32.gmra.mrb[0].mxu0 %v30
    %v160 = vpop.f32.mrb[0].mxu0
    %v161 = vadd.f32 0.0, %v160
    %v162 = vpop.f32.mrb[0].mxu0
    %163 = vmatprep.mubr.f32.mxu0 %v73
    %164 = vmatmul.mubr.f32.gmra.mrb[0].mxu0 %v32
    %v165 = vpop.f32.mrb[0].mxu0
    %v166 = vadd.f32 0.0, %v165
    %v167 = vpop.f32.mrb[0].mxu0
    %168 = vdwg.mxu0
    %v169 = vmax.f32 %v146, 0.0
    %v170 = vmax.f32 %v151, 0.0
    %v171 = vmax.f32 %v156, 0.0
    %v172 = vmax.f32 %v161, 0.0
    %v173 = vmax.f32 %v166, 0.0
    %vm179 = vcmask 1046528
    %v180 = vrot.slane %v169, 1
    %v181 = vrot.slane %v170, 1
    %v182 = vsel %vm179, %v180, %v181
    %v183 = vrot.slane %v171, 1
    %v184 = vsel %vm179, %v181, %v183
    %v185 = vrot.slane %v172, 1
    %v186 = vsel %vm179, %v183, %v185
    %v187 = vrot.slane %v173, 1
    %v188 = vsel %vm179, %v185, %v187
    %vm194 = vcmask 1045504
    %v195 = vrot.slane %v169, 2
    %v196 = vrot.slane %v170, 2
    %v197 = vsel %vm194, %v195, %v196
    %v198 = vrot.slane %v171, 2
    %v199 = vsel %vm194, %v196, %v198
    %v200 = vrot.slane %v172, 2
    %v201 = vsel %vm194, %v198, %v200
    %v202 = vrot.slane %v173, 2
    %v203 = vsel %vm194, %v200, %v202
    %v209 = vld [vmem:[%s2] sm:$0xff]
    %v210 = vld [vmem:[%s2 + $0x8] sm:$0xff]
    %v211 = vld [vmem:[%s2 + $0x10] sm:$0xff]
    %v212 = vld [vmem:[%s2 + $0x18] sm:$0xff]
    %v213 = vld [vmem:[%s2 + $0x20] sm:$0xff]
    %v214 = vld [vmem:[%s2 + $0x28] sm:$0xff]
    %v215 = vld [vmem:[%s2 + $0x30] sm:$0xff]
    %v216 = vld [vmem:[%s2 + $0x38] sm:$0xff]
    %v217 = vld [vmem:[%s2 + $0x40] sm:$0xff]
    %v218 = vld [vmem:[%s2 + $0x48] sm:$0xff]
    %v219 = vld [vmem:[%s2 + $0x50] sm:$0xff]
    %v220 = vld [vmem:[%s2 + $0x58] sm:$0xff]
    %v221 = vld [vmem:[%s2 + $0x60] sm:$0xff]
    %v222 = vld [vmem:[%s2 + $0x68] sm:$0xff]
    %v223 = vld [vmem:[%s2 + $0x70] sm:$0xff]
    %v224 = vld [vmem:[%s2 + $0x78] sm:$0xff]
    %v225 = vld [vmem:[%s2 + $0x80] sm:$0xff]
    %v226 = vld [vmem:[%s2 + $0x88] sm:$0xff]
    %v227 = vld [vmem:[%s2 + $0x90] sm:$0xff]
    %v228 = vld [vmem:[%s2 + $0x98] sm:$0xff]
    %v229 = vld [vmem:[%s2 + $0xa0] sm:$0xff]
    %v230 = vld [vmem:[%s2 + $0xa8] sm:$0xff]
    %v231 = vld [vmem:[%s2 + $0xb0] sm:$0xff]
    %v232 = vld [vmem:[%s2 + $0xb8] sm:$0xff]
    %v233 = vld [vmem:[%s2 + $0xc0] sm:$0xff]
    %v234 = vld [vmem:[%s2 + $0xc8] sm:$0xff]
    %v235 = vld [vmem:[%s2 + $0xd0] sm:$0xff]
    %v236 = vld [vmem:[%s2 + $0xd8] sm:$0xff]
    %v237 = vld [vmem:[%s2 + $0xe0] sm:$0xff]
    %v238 = vld [vmem:[%s2 + $0xe8] sm:$0xff]
    %v239 = vld [vmem:[%s2 + $0xf0] sm:$0xff]
    %v240 = vld [vmem:[%s2 + $0xf8] sm:$0xff]
    %v241 = vld [vmem:[%s2 + $0x100] sm:$0xff]
    %v242 = vld [vmem:[%s2 + $0x108] sm:$0xff]
    %v243 = vld [vmem:[%s2 + $0x110] sm:$0xff]
    %v244 = vld [vmem:[%s2 + $0x118] sm:$0xff]
    %v245 = vld [vmem:[%s2 + $0x120] sm:$0xff]
    %v246 = vld [vmem:[%s2 + $0x128] sm:$0xff]
    %v247 = vld [vmem:[%s2 + $0x130] sm:$0xff]
    %v248 = vld [vmem:[%s2 + $0x138] sm:$0xff]
    %v249 = vld [vmem:[%s2 + $0x140] sm:$0xff]
    %v250 = vld [vmem:[%s2 + $0x148] sm:$0xff]
    %v251 = vld [vmem:[%s2 + $0x150] sm:$0xff]
    %v252 = vld [vmem:[%s2 + $0x158] sm:$0xff]
    %v253 = vld [vmem:[%s2 + $0x160] sm:$0xff]
    %v254 = vld [vmem:[%s2 + $0x168] sm:$0xff]
    %v255 = vld [vmem:[%s2 + $0x170] sm:$0xff]
    %v256 = vld [vmem:[%s2 + $0x178] sm:$0xff]
    %v257 = vld [vmem:[%s5] sm:$0x1]
    %v258 = vlaneseq
    %v259 = vshrl.u32 %v258, 7
    %v260 = vsub.s32 0, %v259
    %v261 = vrot.slane %v257, %v260
    %262 = vmatprep.subr.mxu0 0.0
    %263 = vmatpush1.msra.mxu0 %v209
    %264 = vmatprep.subr.mxu0 0.0
    %265 = vmatpush1.msra.mxu0 %v210
    %266 = vmatprep.subr.mxu0 0.0
    %267 = vmatpush1.msra.mxu0 %v211
    %268 = vmatprep.subr.mxu0 0.0
    %269 = vmatpush1.msra.mxu0 %v212
    %270 = vmatprep.subr.mxu0 0.0
    %271 = vmatpush1.msra.mxu0 %v213
    %272 = vmatprep.subr.mxu0 0.0
    %273 = vmatpush1.msra.mxu0 %v214
    %274 = vmatprep.subr.mxu0 0.0
    %275 = vmatpush1.msra.mxu0 %v215
    %276 = vmatprep.subr.mxu0 0.0
    %277 = vmatpush1.msra.mxu0 %v216
    %278 = vmatprep.subr.mxu0 0.0
    %279 = vmatpush1.msra.mxu0 %v217
    %280 = vmatprep.subr.mxu0 0.0
    %281 = vmatpush1.msra.mxu0 %v218
    %282 = vmatprep.subr.mxu0 0.0
    %283 = vmatpush1.msra.mxu0 %v219
    %284 = vmatprep.subr.mxu0 0.0
    %285 = vmatpush1.msra.mxu0 %v220
    %286 = vmatprep.subr.mxu0 0.0
    %287 = vmatpush1.msra.mxu0 %v221
    %288 = vmatprep.subr.mxu0 0.0
    %289 = vmatpush1.msra.mxu0 %v222
    %290 = vmatprep.subr.mxu0 0.0
    %291 = vmatpush1.msra.mxu0 %v223
    %292 = vmatprep.subr.mxu0 0.0
    %293 = vmatpush1.msra.mxu0 %v224
    %294 = vmatprep.subr.mxu0 0.0
    %295 = vmatpush1.msra.mxu0 %v225
    %296 = vmatprep.subr.mxu0 0.0
    %297 = vmatpush1.msra.mxu0 %v226
    %298 = vmatprep.subr.mxu0 0.0
    %299 = vmatpush1.msra.mxu0 %v227
    %300 = vmatprep.subr.mxu0 0.0
    %301 = vmatpush1.msra.mxu0 %v228
    %302 = vmatprep.subr.mxu0 0.0
    %303 = vmatpush1.msra.mxu0 %v229
    %304 = vmatprep.subr.mxu0 0.0
    %305 = vmatpush1.msra.mxu0 %v230
    %306 = vmatprep.subr.mxu0 0.0
    %307 = vmatpush1.msra.mxu0 %v231
    %308 = vmatprep.subr.mxu0 0.0
    %309 = vmatpush1.msra.mxu0 %v232
    %310 = vmatprep.subr.mxu0 0.0
    %311 = vmatpush1.msra.mxu0 %v233
    %312 = vmatprep.subr.mxu0 0.0
    %313 = vmatpush1.msra.mxu0 %v234
    %314 = vmatprep.subr.mxu0 0.0
    %315 = vmatpush1.msra.mxu0 %v235
    %316 = vmatprep.subr.mxu0 0.0
    %317 = vmatpush1.msra.mxu0 %v236
    %318 = vmatprep.subr.mxu0 0.0
    %319 = vmatpush1.msra.mxu0 %v237
    %320 = vmatprep.subr.mxu0 0.0
    %321 = vmatpush1.msra.mxu0 %v238
    %322 = vmatprep.subr.mxu0 0.0
    %323 = vmatpush1.msra.mxu0 %v239
    %324 = vmatprep.subr.mxu0 0.0
    %325 = vmatpush1.msra.mxu0 %v240
    %326 = vmatprep.mubr.f32.mxu0 %v182
    %327 = vmatmul.mubr.f32.gmra.mrb[0].mxu0 %v169
    %v328 = vpop.f32.mrb[0].mxu0
    %v329 = vadd.f32 %v261, %v328
    %v330 = vpop.f32.mrb[0].mxu0
    %331 = vmatprep.mubr.f32.mxu0 %v184
    %332 = vmatmul.mubr.f32.gmra.mrb[0].mxu0 %v170
    %v333 = vpop.f32.mrb[0].mxu0
    %v334 = vadd.f32 %v261, %v333
    %v335 = vpop.f32.mrb[0].mxu0
    %336 = vmatprep.mubr.f32.mxu0 %v186
    %337 = vmatmul.mubr.f32.gmra.mrb[0].mxu0 %v171
    %v338 = vpop.f32.mrb[0].mxu0
    %v339 = vadd.f32 %v261, %v338
    %v340 = vpop.f32.mrb[0].mxu0
    %341 = vmatprep.mubr.f32.mxu0 %v188
    %342 = vmatmul.mubr.f32.gmra.mrb[0].mxu0 %v172
    %v343 = vpop.f32.mrb[0].mxu0
    %v344 = vadd.f32 %v261, %v343
    %v345 = vpop.f32.mrb[0].mxu0
    %346 = vmatprep.mubr.f32.mxu0 %v187
    %347 = vmatmul.mubr.f32.gmra.mrb[0].mxu0 %v173
    %v348 = vpop.f32.mrb[0].mxu0
    %v349 = vadd.f32 %v261, %v348
    %v350 = vpop.f32.mrb[0].mxu0
    %351 = vdwg.mxu0
    %352 = vmatprep.subr.mxu0 0.0
    %353 = vmatpush1.msra.mxu0 %v241
    %354 = vmatprep.subr.mxu0 0.0
    %355 = vmatpush1.msra.mxu0 %v242
    %356 = vmatprep.subr.mxu0 0.0
    %357 = vmatpush1.msra.mxu0 %v243
    %358 = vmatprep.subr.mxu0 0.0
    %359 = vmatpush1.msra.mxu0 %v244
    %360 = vmatprep.subr.mxu0 0.0
    %361 = vmatpush1.msra.mxu0 %v245
    %362 = vmatprep.subr.mxu0 0.0
    %363 = vmatpush1.msra.mxu0 %v246
    %364 = vmatprep.subr.mxu0 0.0
    %365 = vmatpush1.msra.mxu0 %v247
    %366 = vmatprep.subr.mxu0 0.0
    %367 = vmatpush1.msra.mxu0 %v248
    %368 = vmatprep.subr.mxu0 0.0
    %369 = vmatpush1.msra.mxu0 %v249
    %370 = vmatprep.subr.mxu0 0.0
    %371 = vmatpush1.msra.mxu0 %v250
    %372 = vmatprep.subr.mxu0 0.0
    %373 = vmatpush1.msra.mxu0 %v251
    %374 = vmatprep.subr.mxu0 0.0
    %375 = vmatpush1.msra.mxu0 %v252
    %376 = vmatprep.subr.mxu0 0.0
    %377 = vmatpush1.msra.mxu0 %v253
    %378 = vmatprep.subr.mxu0 0.0
    %379 = vmatpush1.msra.mxu0 %v254
    %380 = vmatprep.subr.mxu0 0.0
    %381 = vmatpush1.msra.mxu0 %v255
    %382 = vmatprep.subr.mxu0 0.0
    %383 = vmatpush1.msra.mxu0 %v256
    %384 = vmatprep.subr.mxu0 0.0
    %385 = vmatpush1.msra.mxu0 0.0
    %386 = vmatprep.subr.mxu0 0.0
    %387 = vmatpush1.msra.mxu0 0.0
    %388 = vmatprep.subr.mxu0 0.0
    %389 = vmatpush1.msra.mxu0 0.0
    %390 = vmatprep.subr.mxu0 0.0
    %391 = vmatpush1.msra.mxu0 0.0
    %392 = vmatprep.subr.mxu0 0.0
    %393 = vmatpush1.msra.mxu0 0.0
    %394 = vmatprep.subr.mxu0 0.0
    %395 = vmatpush1.msra.mxu0 0.0
    %396 = vmatprep.subr.mxu0 0.0
    %397 = vmatpush1.msra.mxu0 0.0
    %398 = vmatprep.subr.mxu0 0.0
    %399 = vmatpush1.msra.mxu0 0.0
    %400 = vmatprep.subr.mxu0 0.0
    %401 = vmatpush1.msra.mxu0 0.0
    %402 = vmatprep.subr.mxu0 0.0
    %403 = vmatpush1.msra.mxu0 0.0
    %404 = vmatprep.subr.mxu0 0.0
    %405 = vmatpush1.msra.mxu0 0.0
    %406 = vmatprep.subr.mxu0 0.0
    %407 = vmatpush1.msra.mxu0 0.0
    %408 = vmatprep.subr.mxu0 0.0
    %409 = vmatpush1.msra.mxu0 0.0
    %410 = vmatprep.subr.mxu0 0.0
    %411 = vmatpush1.msra.mxu0 0.0
    %412 = vmatprep.subr.mxu0 0.0
    %413 = vmatpush1.msra.mxu0 0.0
    %414 = vmatprep.subr.mxu0 0.0
    %415 = vmatpush1.msra.mxu0 0.0
    %416 = vmatprep.mubr.f32.mxu0 0.0
    %417 = vmatmul.mubr.f32.gmra.mrb[0].mxu0 %v197
    %v418 = vpop.f32.mrb[0].mxu0
    %v419 = vadd.f32 %v329, %v418
    %v420 = vpop.f32.mrb[0].mxu0
    %421 = vmatprep.mubr.f32.mxu0 0.0
    %422 = vmatmul.mubr.f32.gmra.mrb[0].mxu0 %v199
    %v423 = vpop.f32.mrb[0].mxu0
    %v424 = vadd.f32 %v334, %v423
    %v425 = vpop.f32.mrb[0].mxu0
    %426 = vmatprep.mubr.f32.mxu0 0.0
    %427 = vmatmul.mubr.f32.gmra.mrb[0].mxu0 %v201
    %v428 = vpop.f32.mrb[0].mxu0
    %v429 = vadd.f32 %v339, %v428
    %v430 = vpop.f32.mrb[0].mxu0
    %431 = vmatprep.mubr.f32.mxu0 0.0
    %432 = vmatmul.mubr.f32.gmra.mrb[0].mxu0 %v203
    %v433 = vpop.f32.mrb[0].mxu0
    %v434 = vadd.f32 %v344, %v433
    %v435 = vpop.f32.mrb[0].mxu0
    %436 = vmatprep.mubr.f32.mxu0 0.0
    %437 = vmatmul.mubr.f32.gmra.mrb[0].mxu0 %v202
    %v438 = vpop.f32.mrb[0].mxu0
    %v439 = vadd.f32 %v349, %v438
    %v440 = vpop.f32.mrb[0].mxu0
    %441 = vdwg.mxu0
    %v442 = vmax.f32 %v419, 0.0
    %v443 = vmax.f32 %v424, 0.0
    %v444 = vmax.f32 %v429, 0.0
    %v445 = vmax.f32 %v434, 0.0
    %v446 = vmax.f32 %v439, 0.0
    %v452 = vrot.slane %v442, 1
    %v453 = vrot.slane %v443, 1
    %v454 = vsel %vm179, %v452, %v453
    %v455 = vrot.slane %v444, 1
    %v456 = vsel %vm179, %v453, %v455
    %v457 = vrot.slane %v445, 1
    %v458 = vsel %vm179, %v455, %v457
    %v459 = vrot.slane %v446, 1
    %v460 = vsel %vm179, %v457, %v459
    %v466 = vmax.f32 %v442, %v454
    %v467 = vmax.f32 %v443, %v456
    %v468 = vmax.f32 %v444, %v458
    %v469 = vmax.f32 %v445, %v460
    %v470 = vmax.f32 %v446, %v459
    %476 = vrot.lane.b32.xlu0 %v466, 64
    %v477 = vpop.permute.xlu0 %476
    %478 = vrot.lane.b32.xlu0 %v467, 64
    %v479 = vpop.permute.xlu0 %478
    %480 = vrot.lane.b32.xlu0 %v468, 64
    %v481 = vpop.permute.xlu0 %480
    %482 = vrot.lane.b32.xlu0 %v469, 64
    %v483 = vpop.permute.xlu0 %482
    %484 = vrot.lane.b32.xlu0 %v470, 64
    %v485 = vpop.permute.xlu0 %484
    %v491 = vmax.f32 %v466, %v477
    %v492 = vmax.f32 %v467, %v479
    %v493 = vmax.f32 %v468, %v481
    %v494 = vmax.f32 %v469, %v483
    %v495 = vmax.f32 %v470, %v485
    %vm496 = vcmask 516096
    %497 = vst.msk [vmem:[#allocation2] sm:$0x1] %vm496, %v491
    %v500 = vunpack.c.l.s4 1983009808
    %v501 = vunpack.c.0.s8 %v500
    %v502 = vlaneseq
    %v503 = vshrl.u32 %v502, 7
    %v504 = vsub.s32 %v501, %v503
    %v505 = vrot.slane %v491, %v504
    %v506 = vcombine.high %v505, %v505
    %507 = vrot.lane.b32.xlu0 %v506, 64
    %v508 = vpop.permute.xlu0 %507
    %vm510 = vcmask 1040896
    %511 = vst.msk [vmem:[#allocation2] sm:$0x1] %vm510, %v508
    %v512 = vcombine.high %v491, %v491
    %v514 = vunpack.c.l.s4 1983009808
    %v515 = vunpack.c.0.s8 %v514
    %v516 = vlaneseq
    %v517 = vshrl.u32 %v516, 7
    %v518 = vsub.s32 %v515, %v517
    %v519 = vrot.slane %v512, %v518
    %521 = vst.msk [vmem:[#allocation2 + $0x2] sm:$0x1] %vm496, %v519
    %v522 = vcombine.high %v519, %v519
    %523 = vrot.lane.b32.xlu0 %v522, 64
    %v524 = vpop.permute.xlu0 %523
    %526 = vst.msk [vmem:[#allocation2 + $0x2] sm:$0x1] %vm510, %v524
    %527 = vst.msk [vmem:[#allocation2 + $0x4] sm:$0x1] %vm496, %v492
    %v530 = vunpack.c.l.s4 1983009808
    %v531 = vunpack.c.0.s8 %v530
    %v532 = vlaneseq
    %v533 = vshrl.u32 %v532, 7
    %v534 = vsub.s32 %v531, %v533
    %v535 = vrot.slane %v492, %v534
    %v536 = vcombine.high %v535, %v535
    %537 = vrot.lane.b32.xlu0 %v536, 64
    %v538 = vpop.permute.xlu0 %537
    %540 = vst.msk [vmem:[#allocation2 + $0x4] sm:$0x1] %vm510, %v538
    %v541 = vcombine.high %v492, %v492
    %v543 = vunpack.c.l.s4 1983009808
    %v544 = vunpack.c.0.s8 %v543
    %v545 = vlaneseq
    %v546 = vshrl.u32 %v545, 7
    %v547 = vsub.s32 %v544, %v546
    %v548 = vrot.slane %v541, %v547
    %550 = vst.msk [vmem:[#allocation2 + $0x6] sm:$0x1] %vm496, %v548
    %v551 = vcombine.high %v548, %v548
    %552 = vrot.lane.b32.xlu0 %v551, 64
    %v553 = vpop.permute.xlu0 %552
    %555 = vst.msk [vmem:[#allocation2 + $0x6] sm:$0x1] %vm510, %v553
    %v558 = vunpack.c.l.s4 1983009808
    %v559 = vunpack.c.0.s8 %v558
    %v560 = vlaneseq
    %v561 = vshrl.u32 %v560, 7
    %v562 = vsub.s32 %v559, %v561
    %v563 = vrot.slane %v493, %v562
    %v564 = vcombine.high %v563, %v563
    %566 = vst.msk [vmem:[#allocation2 + $0x1] sm:$0x1] %vm496, %v564
    %v567 = vcombine.high %v493, %v493
    %v569 = vunpack.c.l.s4 1983009808
    %v570 = vunpack.c.0.s8 %v569
    %v571 = vlaneseq
    %v572 = vshrl.u32 %v571, 7
    %v573 = vsub.s32 %v570, %v572
    %v574 = vrot.slane %v567, %v573
    %575 = vrot.lane.b32.xlu0 %v574, 64
    %v576 = vpop.permute.xlu0 %575
    %578 = vst.msk [vmem:[#allocation2 + $0x1] sm:$0x1] %vm510, %v576
    %v579 = vcombine.high %v574, %v574
    %581 = vst.msk [vmem:[#allocation2 + $0x3] sm:$0x1] %vm496, %v579
    %v584 = vunpack.c.l.s4 1983009808
    %v585 = vunpack.c.0.s8 %v584
    %v586 = vlaneseq
    %v587 = vshrl.u32 %v586, 7
    %v588 = vsub.s32 %v585, %v587
    %v589 = vrot.slane %v494, %v588
    %590 = vrot.lane.b32.xlu0 %v589, 64
    %v591 = vpop.permute.xlu0 %590
    %593 = vst.msk [vmem:[#allocation2 + $0x3] sm:$0x1] %vm510, %v591
    %v594 = vcombine.high %v589, %v589
    %596 = vst.msk [vmem:[#allocation2 + $0x5] sm:$0x1] %vm496, %v594
    %v597 = vcombine.high %v494, %v494
    %v599 = vunpack.c.l.s4 1983009808
    %v600 = vunpack.c.0.s8 %v599
    %v601 = vlaneseq
    %v602 = vshrl.u32 %v601, 7
    %v603 = vsub.s32 %v600, %v602
    %v604 = vrot.slane %v597, %v603
    %605 = vrot.lane.b32.xlu0 %v604, 64
    %v606 = vpop.permute.xlu0 %605
    %608 = vst.msk [vmem:[#allocation2 + $0x5] sm:$0x1] %vm510, %v606
    %v609 = vcombine.high %v604, %v604
    %611 = vst.msk [vmem:[#allocation2 + $0x7] sm:$0x1] %vm496, %v609
    %v614 = vunpack.c.l.s4 1983009808
    %v615 = vunpack.c.0.s8 %v614
    %v616 = vlaneseq
    %v617 = vshrl.u32 %v616, 7
    %v618 = vsub.s32 %v615, %v617
    %v619 = vrot.slane %v495, %v618
    %620 = vrot.lane.b32.xlu0 %v619, 64
    %v621 = vpop.permute.xlu0 %620
    %623 = vst.msk [vmem:[#allocation2 + $0x7] sm:$0x1] %vm510, %v621
    %v624 = vld [vmem:[#allocation2] sm:$0xff]
    %v625 = vld [vmem:[%s3] sm:$0xff]
    %v626 = vld [vmem:[%s3 + $0x8] sm:$0xff]
    %v627 = vld [vmem:[%s3 + $0x10] sm:$0xff]
    %v628 = vld [vmem:[%s3 + $0x18] sm:$0xff]
    %v629 = vld [vmem:[%s3 + $0x20] sm:$0xff]
    %v630 = vld [vmem:[%s3 + $0x28] sm:$0xff]
    %v631 = vld [vmem:[%s3 + $0x30] sm:$0xff]
    %v632 = vld [vmem:[%s3 + $0x38] sm:$0xff]
    %v633 = vld [vmem:[%s3 + $0x40] sm:$0xff]
    %v634 = vld [vmem:[%s3 + $0x48] sm:$0xff]
    %v635 = vld [vmem:[%s3 + $0x50] sm:$0xff]
    %v636 = vld [vmem:[%s3 + $0x58] sm:$0xff]
    %v637 = vld [vmem:[%s3 + $0x60] sm:$0xff]
    %v638 = vld [vmem:[%s3 + $0x68] sm:$0xff]
    %v639 = vld [vmem:[%s3 + $0x70] sm:$0xff]
    %v640 = vld [vmem:[%s3 + $0x78] sm:$0xff]
    %v641 = vld [vmem:[%s3 + $0x80] sm:$0xff]
    %v642 = vld [vmem:[%s3 + $0x88] sm:$0xff]
    %v643 = vld [vmem:[%s3 + $0x90] sm:$0xff]
    %v644 = vld [vmem:[%s3 + $0x98] sm:$0xff]
    %v645 = vld [vmem:[%s3 + $0xa0] sm:$0xff]
    %v646 = vld [vmem:[%s3 + $0xa8] sm:$0xff]
    %v647 = vld [vmem:[%s3 + $0xb0] sm:$0xff]
    %v648 = vld [vmem:[%s3 + $0xb8] sm:$0xff]
    %v649 = vld [vmem:[%s3 + $0xc0] sm:$0xff]
    %v650 = vld [vmem:[%s3 + $0xc8] sm:$0xff]
    %v651 = vld [vmem:[%s3 + $0xd0] sm:$0xff]
    %v652 = vld [vmem:[%s3 + $0xd8] sm:$0xff]
    %v653 = vld [vmem:[%s3 + $0xe0] sm:$0xff]
    %v654 = vld [vmem:[%s3 + $0xe8] sm:$0xff]
    %v655 = vld [vmem:[%s3 + $0xf0] sm:$0xff]
    %v656 = vld [vmem:[%s3 + $0xf8] sm:$0xff]
    %v657 = vld [vmem:[%s3 + $0x100] sm:$0xff]
    %v658 = vld [vmem:[%s3 + $0x108] sm:$0xff]
    %v659 = vld [vmem:[%s3 + $0x110] sm:$0xff]
    %v660 = vld [vmem:[%s3 + $0x118] sm:$0xff]
    %v661 = vld [vmem:[%s3 + $0x120] sm:$0xff]
    %v662 = vld [vmem:[%s3 + $0x128] sm:$0xff]
    %v663 = vld [vmem:[%s3 + $0x130] sm:$0xff]
    %v664 = vld [vmem:[%s3 + $0x138] sm:$0xff]
    %v665 = vld [vmem:[%s3 + $0x140] sm:$0xff]
    %v666 = vld [vmem:[%s3 + $0x148] sm:$0xff]
    %v667 = vld [vmem:[%s3 + $0x150] sm:$0xff]
    %v668 = vld [vmem:[%s3 + $0x158] sm:$0xff]
    %v669 = vld [vmem:[%s3 + $0x160] sm:$0xff]
    %v670 = vld [vmem:[%s3 + $0x168] sm:$0xff]
    %v671 = vld [vmem:[%s3 + $0x170] sm:$0xff]
    %v672 = vld [vmem:[%s3 + $0x178] sm:$0xff]
    %v673 = vld [vmem:[%s3 + $0x180] sm:$0xff]
    %v674 = vld [vmem:[%s3 + $0x188] sm:$0xff]
    %v675 = vld [vmem:[%s3 + $0x190] sm:$0xff]
    %v676 = vld [vmem:[%s3 + $0x198] sm:$0xff]
    %v677 = vld [vmem:[%s3 + $0x1a0] sm:$0xff]
    %v678 = vld [vmem:[%s3 + $0x1a8] sm:$0xff]
    %v679 = vld [vmem:[%s3 + $0x1b0] sm:$0xff]
    %v680 = vld [vmem:[%s3 + $0x1b8] sm:$0xff]
    %v681 = vld [vmem:[%s3 + $0x1c0] sm:$0xff]
    %v682 = vld [vmem:[%s3 + $0x1c8] sm:$0xff]
    %v683 = vld [vmem:[%s3 + $0x1d0] sm:$0xff]
    %v684 = vld [vmem:[%s3 + $0x1d8] sm:$0xff]
    %v685 = vld [vmem:[%s3 + $0x1e0] sm:$0xff]
    %v686 = vld [vmem:[%s3 + $0x1e8] sm:$0xff]
    %v687 = vld [vmem:[%s3 + $0x1f0] sm:$0xff]
    %v688 = vld [vmem:[%s3 + $0x1f8] sm:$0xff]
    %v689 = vld [vmem:[%s5 + $0x1] sm:$0x1]
    %v690 = vlaneseq
    %v691 = vshrl.u32 %v690, 7
    %v692 = vsub.s32 0, %v691
    %v693 = vrot.slane %v689, %v692
    %v695 = vcombine.high %v624, %v624
    %v697 = vunpack.c.l.s4 1983009808
    %v698 = vunpack.c.0.s8 %v697
    %v699 = vlaneseq
    %v700 = vshrl.u32 %v699, 7
    %v701 = vsub.s32 %v698, %v700
    %v702 = vrot.slane %v624, %v701
    %v704 = vunpack.c.l.s4 1983009808
    %v705 = vunpack.c.0.s8 %v704
    %v706 = vlaneseq
    %v707 = vshrl.u32 %v706, 7
    %v708 = vsub.s32 %v705, %v707
    %v709 = vrot.slane %v695, %v708
    %v710 = vcombine.high %v702, %v702
    %v711 = vcombine.high %v709, %v709
    %716 = vmatprep.subr.mxu0 0.0
    %717 = vmatpush1.msra.mxu0 %v625
    %718 = vmatprep.subr.mxu0 0.0
    %719 = vmatpush1.msra.mxu0 %v626
    %720 = vmatprep.subr.mxu0 0.0
    %721 = vmatpush1.msra.mxu0 %v627
    %722 = vmatprep.subr.mxu0 0.0
    %723 = vmatpush1.msra.mxu0 %v628
    %724 = vmatprep.subr.mxu0 0.0
    %725 = vmatpush1.msra.mxu0 %v629
    %726 = vmatprep.subr.mxu0 0.0
    %727 = vmatpush1.msra.mxu0 %v630
    %728 = vmatprep.subr.mxu0 0.0
    %729 = vmatpush1.msra.mxu0 %v631
    %730 = vmatprep.subr.mxu0 0.0
    %731 = vmatpush1.msra.mxu0 %v632
    %732 = vmatprep.subr.mxu0 0.0
    %733 = vmatpush1.msra.mxu0 %v633
    %734 = vmatprep.subr.mxu0 0.0
    %735 = vmatpush1.msra.mxu0 %v634
    %736 = vmatprep.subr.mxu0 0.0
    %737 = vmatpush1.msra.mxu0 %v635
    %738 = vmatprep.subr.mxu0 0.0
    %739 = vmatpush1.msra.mxu0 %v636
    %740 = vmatprep.subr.mxu0 0.0
    %741 = vmatpush1.msra.mxu0 %v637
    %742 = vmatprep.subr.mxu0 0.0
    %743 = vmatpush1.msra.mxu0 %v638
    %744 = vmatprep.subr.mxu0 0.0
    %745 = vmatpush1.msra.mxu0 %v639
    %746 = vmatprep.subr.mxu0 0.0
    %747 = vmatpush1.msra.mxu0 %v640
    %748 = vmatprep.subr.mxu0 0.0
    %749 = vmatpush1.msra.mxu0 %v641
    %750 = vmatprep.subr.mxu0 0.0
    %751 = vmatpush1.msra.mxu0 %v642
    %752 = vmatprep.subr.mxu0 0.0
    %753 = vmatpush1.msra.mxu0 %v643
    %754 = vmatprep.subr.mxu0 0.0
    %755 = vmatpush1.msra.mxu0 %v644
    %756 = vmatprep.subr.mxu0 0.0
    %757 = vmatpush1.msra.mxu0 %v645
    %758 = vmatprep.subr.mxu0 0.0
    %759 = vmatpush1.msra.mxu0 %v646
    %760 = vmatprep.subr.mxu0 0.0
    %761 = vmatpush1.msra.mxu0 %v647
    %762 = vmatprep.subr.mxu0 0.0
    %763 = vmatpush1.msra.mxu0 %v648
    %764 = vmatprep.subr.mxu0 0.0
    %765 = vmatpush1.msra.mxu0 %v649
    %766 = vmatprep.subr.mxu0 0.0
    %767 = vmatpush1.msra.mxu0 %v650
    %768 = vmatprep.subr.mxu0 0.0
    %769 = vmatpush1.msra.mxu0 %v651
    %770 = vmatprep.subr.mxu0 0.0
    %771 = vmatpush1.msra.mxu0 %v652
    %772 = vmatprep.subr.mxu0 0.0
    %773 = vmatpush1.msra.mxu0 %v653
    %774 = vmatprep.subr.mxu0 0.0
    %775 = vmatpush1.msra.mxu0 %v654
    %776 = vmatprep.subr.mxu0 0.0
    %777 = vmatpush1.msra.mxu0 %v655
    %778 = vmatprep.subr.mxu0 0.0
    %779 = vmatpush1.msra.mxu0 %v656
    %780 = vmatprep.mubr.f32.mxu0 %v710
    %781 = vmatmul.mubr.f32.gmra.mrb[0].mxu0 %v702
    %v782 = vpop.f32.mrb[0].mxu0
    %v783 = vadd.f32 %v693, %v782
    %v784 = vpop.f32.mrb[0].mxu0
    %785 = vdwg.mxu0
    %786 = vmatprep.subr.mxu0 0.0
    %787 = vmatpush1.msra.mxu0 %v657
    %788 = vmatprep.subr.mxu0 0.0
    %789 = vmatpush1.msra.mxu0 %v658
    %790 = vmatprep.subr.mxu0 0.0
    %791 = vmatpush1.msra.mxu0 %v659
    %792 = vmatprep.subr.mxu0 0.0
    %793 = vmatpush1.msra.mxu0 %v660
    %794 = vmatprep.subr.mxu0 0.0
    %795 = vmatpush1.msra.mxu0 %v661
    %796 = vmatprep.subr.mxu0 0.0
    %797 = vmatpush1.msra.mxu0 %v662
    %798 = vmatprep.subr.mxu0 0.0
    %799 = vmatpush1.msra.mxu0 %v663
    %800 = vmatprep.subr.mxu0 0.0
    %801 = vmatpush1.msra.mxu0 %v664
    %802 = vmatprep.subr.mxu0 0.0
    %803 = vmatpush1.msra.mxu0 %v665
    %804 = vmatprep.subr.mxu0 0.0
    %805 = vmatpush1.msra.mxu0 %v666
    %806 = vmatprep.subr.mxu0 0.0
    %807 = vmatpush1.msra.mxu0 %v667
    %808 = vmatprep.subr.mxu0 0.0
    %809 = vmatpush1.msra.mxu0 %v668
    %810 = vmatprep.subr.mxu0 0.0
    %811 = vmatpush1.msra.mxu0 %v669
    %812 = vmatprep.subr.mxu0 0.0
    %813 = vmatpush1.msra.mxu0 %v670
    %814 = vmatprep.subr.mxu0 0.0
    %815 = vmatpush1.msra.mxu0 %v671
    %816 = vmatprep.subr.mxu0 0.0
    %817 = vmatpush1.msra.mxu0 %v672
    %818 = vmatprep.subr.mxu0 0.0
    %819 = vmatpush1.msra.mxu0 %v673
    %820 = vmatprep.subr.mxu0 0.0
    %821 = vmatpush1.msra.mxu0 %v674
    %822 = vmatprep.subr.mxu0 0.0
    %823 = vmatpush1.msra.mxu0 %v675
    %824 = vmatprep.subr.mxu0 0.0
    %825 = vmatpush1.msra.mxu0 %v676
    %826 = vmatprep.subr.mxu0 0.0
    %827 = vmatpush1.msra.mxu0 %v677
    %828 = vmatprep.subr.mxu0 0.0
    %829 = vmatpush1.msra.mxu0 %v678
    %830 = vmatprep.subr.mxu0 0.0
    %831 = vmatpush1.msra.mxu0 %v679
    %832 = vmatprep.subr.mxu0 0.0
    %833 = vmatpush1.msra.mxu0 %v680
    %834 = vmatprep.subr.mxu0 0.0
    %835 = vmatpush1.msra.mxu0 %v681
    %836 = vmatprep.subr.mxu0 0.0
    %837 = vmatpush1.msra.mxu0 %v682
    %838 = vmatprep.subr.mxu0 0.0
    %839 = vmatpush1.msra.mxu0 %v683
    %840 = vmatprep.subr.mxu0 0.0
    %841 = vmatpush1.msra.mxu0 %v684
    %842 = vmatprep.subr.mxu0 0.0
    %843 = vmatpush1.msra.mxu0 %v685
    %844 = vmatprep.subr.mxu0 0.0
    %845 = vmatpush1.msra.mxu0 %v686
    %846 = vmatprep.subr.mxu0 0.0
    %847 = vmatpush1.msra.mxu0 %v687
    %848 = vmatprep.subr.mxu0 0.0
    %849 = vmatpush1.msra.mxu0 %v688
    %850 = vmatprep.mubr.f32.mxu0 %v711
    %851 = vmatmul.mubr.f32.gmra.mrb[0].mxu0 %v709
    %v852 = vpop.f32.mrb[0].mxu0
    %v853 = vadd.f32 %v783, %v852
    %v854 = vpop.f32.mrb[0].mxu0
    %855 = vdwg.mxu0
    %v856 = vmax.f32 %v853, 0.0
    %v857 = vld [vmem:[%s4] sm:$0xff]
    %v858 = vld [vmem:[%s4 + $0x8] sm:$0xff]
    %v859 = vld [vmem:[%s4 + $0x10] sm:$0xff]
    %v860 = vld [vmem:[%s4 + $0x18] sm:$0xff]
    %v861 = vld [vmem:[%s5 + $0x2] sm:$0x1]
    %v862 = vlaneseq
    %v863 = vshrl.u32 %v862, 7
    %v864 = vsub.s32 0, %v863
    %v865 = vrot.slane %v861, %v864
    %vm866 = vcmask 261120
    %v868 = vsel %vm866, %v856, 0
    %870 = vmatprep.subr.mxu0 0.0
    %871 = vmatpush1.msra.mxu0 %v857
    %872 = vmatprep.subr.mxu0 0.0
    %873 = vmatpush1.msra.mxu0 %v858
    %874 = vmatprep.subr.mxu0 0.0
    %875 = vmatpush1.msra.mxu0 %v859
    %876 = vmatprep.subr.mxu0 0.0
    %877 = vmatpush1.msra.mxu0 %v860
    %878 = vmatprep.subr.mxu0 0.0
    %879 = vmatpush1.msra.mxu0 0.0
    %880 = vmatprep.subr.mxu0 0.0
    %881 = vmatpush1.msra.mxu0 0.0
    %882 = vmatprep.subr.mxu0 0.0
    %883 = vmatpush1.msra.mxu0 0.0
    %884 = vmatprep.subr.mxu0 0.0
    %885 = vmatpush1.msra.mxu0 0.0
    %886 = vmatprep.subr.mxu0 0.0
    %887 = vmatpush1.msra.mxu0 0.0
    %888 = vmatprep.subr.mxu0 0.0
    %889 = vmatpush1.msra.mxu0 0.0
    %890 = vmatprep.subr.mxu0 0.0
    %891 = vmatpush1.msra.mxu0 0.0
    %892 = vmatprep.subr.mxu0 0.0
    %893 = vmatpush1.msra.mxu0 0.0
    %894 = vmatprep.subr.mxu0 0.0
    %895 = vmatpush1.msra.mxu0 0.0
    %896 = vmatprep.subr.mxu0 0.0
    %897 = vmatpush1.msra.mxu0 0.0
    %898 = vmatprep.subr.mxu0 0.0
    %899 = vmatpush1.msra.mxu0 0.0
    %900 = vmatprep.subr.mxu0 0.0
    %901 = vmatpush1.msra.mxu0 0.0
    %902 = vmatprep.subr.mxu0 0.0
    %903 = vmatpush1.msra.mxu0 0.0
    %904 = vmatprep.subr.mxu0 0.0
    %905 = vmatpush1.msra.mxu0 0.0
    %906 = vmatprep.subr.mxu0 0.0
    %907 = vmatpush1.msra.mxu0 0.0
    %908 = vmatprep.subr.mxu0 0.0
    %909 = vmatpush1.msra.mxu0 0.0
    %910 = vmatprep.subr.mxu0 0.0
    %911 = vmatpush1.msra.mxu0 0.0
    %912 = vmatprep.subr.mxu0 0.0
    %913 = vmatpush1.msra.mxu0 0.0
    %914 = vmatprep.subr.mxu0 0.0
    %915 = vmatpush1.msra.mxu0 0.0
    %916 = vmatprep.subr.mxu0 0.0
    %917 = vmatpush1.msra.mxu0 0.0
    %918 = vmatprep.subr.mxu0 0.0
    %919 = vmatpush1.msra.mxu0 0.0
    %920 = vmatprep.subr.mxu0 0.0
    %921 = vmatpush1.msra.mxu0 0.0
    %922 = vmatprep.subr.mxu0 0.0
    %923 = vmatpush1.msra.mxu0 0.0
    %924 = vmatprep.subr.mxu0 0.0
    %925 = vmatpush1.msra.mxu0 0.0
    %926 = vmatprep.subr.mxu0 0.0
    %927 = vmatpush1.msra.mxu0 0.0
    %928 = vmatprep.subr.mxu0 0.0
    %929 = vmatpush1.msra.mxu0 0.0
    %930 = vmatprep.subr.mxu0 0.0
    %931 = vmatpush1.msra.mxu0 0.0
    %932 = vmatprep.subr.mxu0 0.0
    %933 = vmatpush1.msra.mxu0 0.0
    %934 = vmatprep.mubr.f32.mxu0 0.0
    %935 = vmatmul.mubr.f32.gmra.mrb[0].mxu0 %v868
    %v936 = vpop.f32.mrb[0].mxu0
    %v937 = vadd.f32 %v865, %v936
    %v938 = vpop.f32.mrb[0].mxu0
    %939 = vdwg.mxu0
    %vm940 = vcmask 74752
    %941 = vst.msk [vmem:[#allocation3] sm:$0x3] %vm940, %v937
    // Predicated region
    $region26: #{cnn_forward.1} parent=1 // pred_check
      _
    $region27: #{cnn_forward.1} parent=1 // pred_check_branch
      %943 = sbr.rel (0) target = $region29
    $region28: #{cnn_forward.1} parent=1 // pred_region
      %s945 = ssub.s32 32, 32
      %946 = vsyncadd [#allocation4], %s945
      %s948 = sshll.u32 [#allocation3], 4
      %s949 = int_to_ptr.vmem [resolvable:$true] %s948
      %951 = dma.vmem_to_hbm [thread:$0]  %s949, 32, %s6, [#allocation4]
    $region29: #{cnn_forward.1} parent=1 // pred_fallthru
      _
    // Predicated region
    $region30: #{cnn_forward.1} parent=1 // pred_check
      _
    $region31: #{cnn_forward.1} parent=1 // pred_check_branch
      %953 = sbr.rel (0) target = $region33
    $region32: #{cnn_forward.1} parent=1 // pred_region
      %954 = dma.done [#allocation4], 32
    $region33: #{cnn_forward.1} parent=1 // pred_fallthru
      _
    %955 = vsyncpa [#allocation4], 1

</llo_original>
